<compile_context>
chip_gen: v7x
topology: tpu7x:2x2x1
jax: 0.10.0
libtpu: 0.0.40
codegen_flags: <defaults>
</compile_context>

<pallas_src>
import functools

import jax
import jax.numpy as jnp
from jax import lax
from jax.experimental import pallas as pl
from jax.experimental.pallas import tpu as pltpu


def _conv_bn_relu_kernel(x_ref, w_ref, b_ref, o_ref, *,
                         kh_size, kw_size, dilation, th, w_out, c_out_pad):
    """One (batch, output-row-tile) per grid step.

    x_ref: (Hp, Wp, Cin)           full padded NHWC image of this batch (bf16)
    w_ref: (KH*KW*Cin, Cout_pad)   BN-scale-folded conv weight (bf16)
    b_ref: (1, Cout_pad)           folded BN bias (f32)
    o_ref: (TH, Wo, Cout_pad)      output row tile (f32, lane-dense)
    """
    r = pl.program_id(1)
    row0 = pl.multiple_of(r * th, th)

    # im2col: gather the KH*KW shifted windows and stack them on the lane
    # axis so the whole conv is a single MXU contraction of size KH*KW*Cin.
    cols = []
    for kh in range(kh_size):
        for kw in range(kw_size):
            win = x_ref[pl.ds(row0 + kh * dilation, th),
                        pl.ds(kw * dilation, w_out),
                        :]                                    # (TH, Wo, Cin)
            cols.append(win.reshape(th * w_out, win.shape[-1]))
    patch2d = jnp.concatenate(cols, axis=-1)                  # (M, KH*KW*Cin)

    acc = jnp.dot(patch2d, w_ref[...],
                  preferred_element_type=jnp.float32)         # (M, Cout_pad)

    y = jnp.maximum(acc + b_ref[...], 0.0)                    # fused bias + ReLU
    o_ref[...] = y.reshape(th, w_out, c_out_pad).astype(o_ref.dtype)


def _pick_row_tile(h_out, w_out, cap=512):
    """Largest divisor TH of h_out with TH*Wo <= cap; prefer >=2 row tiles."""
    best = 1
    for cand in range(1, h_out + 1):
        if h_out % cand == 0 and cand * w_out <= cap:
            best = cand
    if best == h_out and h_out % 2 == 0 and best > 1:
        best = h_out // 2   # give the second TensorCore (v7x) parallel work
    return best


def conv_module_forward(x_nchw, weight_oihw, gamma, beta, running_mean,
                        running_var, *, padding, dilation, eps=1e-5):
    """Forward pass of ConvModule: Conv2d(stride=1, bias=False) + BN(eval) + ReLU."""
    n, c_in, h, w = x_nchw.shape
    c_out, c_in_w, kh, kw = weight_oihw.shape
    assert c_in == c_in_w
    # stride is fixed to 1 (as in ConvModule); the output-size formula and the
    # shifted-window slicing below assume it.
    h_out = h + 2 * padding - dilation * (kh - 1)
    w_out = w + 2 * padding - dilation * (kw - 1)

    c_out_pad = ((c_out + 127) // 128) * 128
    k_dim = kh * kw * c_in
    th = _pick_row_tile(h_out, w_out)
    n_row_tiles = h_out // th

    # --- glue: layout conversion, padding, BN folding (plain JAX) ---
    x_nhwc = jnp.transpose(x_nchw, (0, 2, 3, 1))                       # N,H,W,C
    x_pad = jnp.pad(x_nhwc,
                    ((0, 0), (padding, padding), (padding, padding), (0, 0)))
    x_pad = x_pad.astype(jnp.bfloat16)
    hp, wp = x_pad.shape[1], x_pad.shape[2]

    scale = gamma / jnp.sqrt(running_var + eps)                        # (Cout,)
    bias = beta - running_mean * scale                                 # (Cout,)
    w_hwio = jnp.transpose(weight_oihw, (2, 3, 1, 0))                  # KH,KW,Cin,Cout
    w2d = (w_hwio * scale).reshape(k_dim, c_out)                       # BN scale folded
    w2d = jnp.pad(w2d, ((0, 0), (0, c_out_pad - c_out))).astype(jnp.bfloat16)
    bias2d = jnp.pad(bias, (0, c_out_pad - c_out)).reshape(1, c_out_pad)
    bias2d = bias2d.astype(jnp.float32)

    kernel = functools.partial(
        _conv_bn_relu_kernel,
        kh_size=kh, kw_size=kw, dilation=dilation,
        th=th, w_out=w_out, c_out_pad=c_out_pad)

    cost = pl.CostEstimate(
        flops=2 * n * h_out * w_out * k_dim * c_out,
        transcendentals=0,
        bytes_accessed=(n * hp * wp * c_in * 2                # bf16 input
                        + k_dim * c_out_pad * 2               # bf16 weight
                        + n * h_out * w_out * c_out_pad * 4)  # f32 output
    )

    out_nhwc = pl.pallas_call(
        kernel,
        out_shape=jax.ShapeDtypeStruct((n, h_out, w_out, c_out_pad),
                                       jnp.float32),
        grid=(n, n_row_tiles),
        in_specs=[
            pl.BlockSpec((None, hp, wp, c_in), lambda b, r: (b, 0, 0, 0)),
            pl.BlockSpec((k_dim, c_out_pad), lambda b, r: (0, 0)),
            pl.BlockSpec((1, c_out_pad), lambda b, r: (0, 0)),
        ],
        out_specs=pl.BlockSpec((None, th, w_out, c_out_pad),
                               lambda b, r: (b, r, 0, 0)),
        compiler_params=pltpu.CompilerParams(
            dimension_semantics=("parallel", "parallel")),
        cost_estimate=cost,
    )(x_pad, w2d, bias2d)

    out_nhwc = out_nhwc[..., :c_out]                   # drop channel padding
    return jnp.transpose(out_nhwc, (0, 3, 1, 2)).astype(x_nchw.dtype)  # NCHW


def _reference_forward_f32(x, weight, gamma, beta, mean, var,
                           *, padding, dilation, eps=1e-5):
    """Pure-f32 JAX reference (lax conv) for sanity checking."""
    y = lax.conv_general_dilated(
        x, weight, window_strides=(1, 1),
        padding=((padding, padding), (padding, padding)),
        rhs_dilation=(dilation, dilation),
        dimension_numbers=("NCHW", "OIHW", "NCHW"))
    s = (gamma / jnp.sqrt(var + eps)).reshape(1, -1, 1, 1)
    b = (beta - mean * gamma / jnp.sqrt(var + eps)).reshape(1, -1, 1, 1)
    return jnp.maximum(y * s + b, 0.0)


def _reference_forward_bf16(x, weight, gamma, beta, mean, var,
                            *, padding, dilation, eps=1e-5):
    """Reference with the same bf16 casts / BN-into-weight folding as the kernel."""
    scale = gamma / jnp.sqrt(var + eps)
    w_scaled = (weight * scale[:, None, None, None]).astype(jnp.bfloat16)
    y = lax.conv_general_dilated(
        x.astype(jnp.bfloat16), w_scaled, window_strides=(1, 1),
        padding=((padding, padding), (padding, padding)),
        rhs_dilation=(dilation, dilation),
        dimension_numbers=("NCHW", "OIHW", "NCHW"),
        preferred_element_type=jnp.float32)
    b = (beta - mean * scale).reshape(1, -1, 1, 1)
    return jnp.maximum(y + b, 0.0)


if __name__ == "__main__":
    # Shapes consistent with ConvModule(in=4, out=8, k=3, pad=2, dil=2).
    batch, c_in, c_out = 2, 4, 8
    h = w = 16
    kernel_size, padding, dilation = 3, 2, 2

    key = jax.random.PRNGKey(0)
    k_x, k_w, k_g, k_b, k_m, k_v = jax.random.split(key, 6)

    x = jax.random.normal(k_x, (batch, c_in, h, w), dtype=jnp.float32)
    weight = jax.random.normal(k_w, (c_out, c_in, kernel_size, kernel_size),
                               dtype=jnp.float32) * 0.1
    gamma = 1.0 + 0.1 * jax.random.normal(k_g, (c_out,), dtype=jnp.float32)
    beta = 0.1 * jax.random.normal(k_b, (c_out,), dtype=jnp.float32)
    running_mean = 0.1 * jax.random.normal(k_m, (c_out,), dtype=jnp.float32)
    running_var = jnp.abs(1.0 + 0.1 * jax.random.normal(k_v, (c_out,),
                                                        dtype=jnp.float32))

    out = conv_module_forward(x, weight, gamma, beta, running_mean, running_var,
                              padding=padding, dilation=dilation)
    out = jax.block_until_ready(out)

    ref_bf16 = _reference_forward_bf16(x, weight, gamma, beta, running_mean,
                                       running_var, padding=padding,
                                       dilation=dilation)
    ref_f32 = _reference_forward_f32(x, weight, gamma, beta, running_mean,
                                     running_var, padding=padding,
                                     dilation=dilation)

    assert out.shape == ref_f32.shape == (batch, c_out, h, w)
    # Tight check vs. a reference that applies the same bf16 quantization.
    assert jnp.max(jnp.abs(out - ref_bf16)) < 2e-3
    # Sanity check vs. the full-f32 reference (bf16 input quantization noise).
    assert jnp.max(jnp.abs(out - ref_f32)) < 5e-2

    print("KERNEL_OK")
</pallas_src>

<mosaic_0001>
module attributes {stable_mosaic.version = 11 : i64} {
  func.func @_conv_bn_relu_kernel(%arg0: i32, %arg1: i32, %arg2: memref<1x20x20x4xbf16, #tpu.memory_space<vmem>>, %arg3: memref<36x128xbf16, #tpu.memory_space<vmem>>, %arg4: memref<1x128xf32, #tpu.memory_space<vmem>>, %arg5: memref<1x8x16x128xf32, #tpu.memory_space<vmem>>) attributes {dimension_semantics = [#tpu.dimension_semantics<parallel>, #tpu.dimension_semantics<parallel>], iteration_bounds = array<i64: 2, 2>, scalar_prefetch = 0 : i64, scratch_operands = 0 : i64, tpu.core_type = #tpu.core_type<tc>, window_params = [{transform_indices = @transform_0, window_bounds = array<i64: 1, 20, 20, 4>}, {pipeline_mode = #tpu.pipeline_mode<synchronous>, transform_indices = @transform_1, window_bounds = array<i64: 36, 128>}, {pipeline_mode = #tpu.pipeline_mode<synchronous>, transform_indices = @transform_2, window_bounds = array<i64: 1, 128>}, {transform_indices = @transform_3, window_bounds = array<i64: 1, 8, 16, 128>}]} {
    %c8_i32 = arith.constant 8 : i32
    %0 = arith.muli %arg1, %c8_i32 : i32
    %1 = tpu.assume_multiple %0, 8 : i32
    %c0_i32 = arith.constant 0 : i32
    %2 = arith.addi %1, %c0_i32 : i32
    %c0 = arith.constant 0 : index
    %3 = arith.index_cast %2 : i32 to index
    %c0_0 = arith.constant 0 : index
    %c0_1 = arith.constant 0 : index
    %4 = vector.load %arg2[%c0, %3, %c0_0, %c0_1] : memref<1x20x20x4xbf16, #tpu.memory_space<vmem>>, vector<1x8x16x4xbf16>
    %5 = vector.shape_cast %4 : vector<1x8x16x4xbf16> to vector<8x16x4xbf16>
    %6 = vector.shape_cast %5 : vector<8x16x4xbf16> to vector<128x4xbf16>
    %c0_i32_2 = arith.constant 0 : i32
    %7 = arith.addi %1, %c0_i32_2 : i32
    %c0_3 = arith.constant 0 : index
    %8 = arith.index_cast %7 : i32 to index
    %c2 = arith.constant 2 : index
    %c0_4 = arith.constant 0 : index
    %9 = vector.load %arg2[%c0_3, %8, %c2, %c0_4] : memref<1x20x20x4xbf16, #tpu.memory_space<vmem>>, vector<1x8x16x4xbf16>
    %10 = vector.shape_cast %9 : vector<1x8x16x4xbf16> to vector<8x16x4xbf16>
    %11 = vector.shape_cast %10 : vector<8x16x4xbf16> to vector<128x4xbf16>
    %c0_i32_5 = arith.constant 0 : i32
    %12 = arith.addi %1, %c0_i32_5 : i32
    %c0_6 = arith.constant 0 : index
    %13 = arith.index_cast %12 : i32 to index
    %c4 = arith.constant 4 : index
    %c0_7 = arith.constant 0 : index
    %14 = vector.load %arg2[%c0_6, %13, %c4, %c0_7] : memref<1x20x20x4xbf16, #tpu.memory_space<vmem>>, vector<1x8x16x4xbf16>
    %15 = vector.shape_cast %14 : vector<1x8x16x4xbf16> to vector<8x16x4xbf16>
    %16 = vector.shape_cast %15 : vector<8x16x4xbf16> to vector<128x4xbf16>
    %c2_i32 = arith.constant 2 : i32
    %17 = arith.addi %1, %c2_i32 : i32
    %c0_8 = arith.constant 0 : index
    %18 = arith.index_cast %17 : i32 to index
    %c0_9 = arith.constant 0 : index
    %c0_10 = arith.constant 0 : index
    %19 = vector.load %arg2[%c0_8, %18, %c0_9, %c0_10] : memref<1x20x20x4xbf16, #tpu.memory_space<vmem>>, vector<1x8x16x4xbf16>
    %20 = vector.shape_cast %19 : vector<1x8x16x4xbf16> to vector<8x16x4xbf16>
    %21 = vector.shape_cast %20 : vector<8x16x4xbf16> to vector<128x4xbf16>
    %c2_i32_11 = arith.constant 2 : i32
    %22 = arith.addi %1, %c2_i32_11 : i32
    %c0_12 = arith.constant 0 : index
    %23 = arith.index_cast %22 : i32 to index
    %c2_13 = arith.constant 2 : index
    %c0_14 = arith.constant 0 : index
    %24 = vector.load %arg2[%c0_12, %23, %c2_13, %c0_14] : memref<1x20x20x4xbf16, #tpu.memory_space<vmem>>, vector<1x8x16x4xbf16>
    %25 = vector.shape_cast %24 : vector<1x8x16x4xbf16> to vector<8x16x4xbf16>
    %26 = vector.shape_cast %25 : vector<8x16x4xbf16> to vector<128x4xbf16>
    %c2_i32_15 = arith.constant 2 : i32
    %27 = arith.addi %1, %c2_i32_15 : i32
    %c0_16 = arith.constant 0 : index
    %28 = arith.index_cast %27 : i32 to index
    %c4_17 = arith.constant 4 : index
    %c0_18 = arith.constant 0 : index
    %29 = vector.load %arg2[%c0_16, %28, %c4_17, %c0_18] : memref<1x20x20x4xbf16, #tpu.memory_space<vmem>>, vector<1x8x16x4xbf16>
    %30 = vector.shape_cast %29 : vector<1x8x16x4xbf16> to vector<8x16x4xbf16>
    %31 = vector.shape_cast %30 : vector<8x16x4xbf16> to vector<128x4xbf16>
    %c4_i32 = arith.constant 4 : i32
    %32 = arith.addi %1, %c4_i32 : i32
    %c0_19 = arith.constant 0 : index
    %33 = arith.index_cast %32 : i32 to index
    %c0_20 = arith.constant 0 : index
    %c0_21 = arith.constant 0 : index
    %34 = vector.load %arg2[%c0_19, %33, %c0_20, %c0_21] : memref<1x20x20x4xbf16, #tpu.memory_space<vmem>>, vector<1x8x16x4xbf16>
    %35 = vector.shape_cast %34 : vector<1x8x16x4xbf16> to vector<8x16x4xbf16>
    %36 = vector.shape_cast %35 : vector<8x16x4xbf16> to vector<128x4xbf16>
    %c4_i32_22 = arith.constant 4 : i32
    %37 = arith.addi %1, %c4_i32_22 : i32
    %c0_23 = arith.constant 0 : index
    %38 = arith.index_cast %37 : i32 to index
    %c2_24 = arith.constant 2 : index
    %c0_25 = arith.constant 0 : index
    %39 = vector.load %arg2[%c0_23, %38, %c2_24, %c0_25] : memref<1x20x20x4xbf16, #tpu.memory_space<vmem>>, vector<1x8x16x4xbf16>
    %40 = vector.shape_cast %39 : vector<1x8x16x4xbf16> to vector<8x16x4xbf16>
    %41 = vector.shape_cast %40 : vector<8x16x4xbf16> to vector<128x4xbf16>
    %c4_i32_26 = arith.constant 4 : i32
    %42 = arith.addi %1, %c4_i32_26 : i32
    %c0_27 = arith.constant 0 : index
    %43 = arith.index_cast %42 : i32 to index
    %c4_28 = arith.constant 4 : index
    %c0_29 = arith.constant 0 : index
    %44 = vector.load %arg2[%c0_27, %43, %c4_28, %c0_29] : memref<1x20x20x4xbf16, #tpu.memory_space<vmem>>, vector<1x8x16x4xbf16>
    %45 = vector.shape_cast %44 : vector<1x8x16x4xbf16> to vector<8x16x4xbf16>
    %46 = vector.shape_cast %45 : vector<8x16x4xbf16> to vector<128x4xbf16>
    %47 = tpu.concatenate %6, %11, %16, %21, %26, %31, %36, %41, %46 in 1 : vector<128x4xbf16>, vector<128x4xbf16>, vector<128x4xbf16>, vector<128x4xbf16>, vector<128x4xbf16>, vector<128x4xbf16>, vector<128x4xbf16>, vector<128x4xbf16>, vector<128x4xbf16> -> vector<128x36xbf16>
    %c0_30 = arith.constant 0 : index
    %c0_31 = arith.constant 0 : index
    %48 = vector.load %arg3[%c0_30, %c0_31] : memref<36x128xbf16, #tpu.memory_space<vmem>>, vector<36x128xbf16>
    %cst = arith.constant dense<0.000000e+00> : vector<128x128xf32>
    %49 = tpu.matmul %47, %48, %cst {dimension_numbers = #tpu.dot_dimension_numbers<[1], [0], [0], [1], [0, 0, 1, 1], [], []>} : vector<128x36xbf16>, vector<36x128xbf16>, vector<128x128xf32> -> vector<128x128xf32>
    %c0_32 = arith.constant 0 : index
    %c0_33 = arith.constant 0 : index
    %50 = vector.load %arg4[%c0_32, %c0_33] : memref<1x128xf32, #tpu.memory_space<vmem>>, vector<1x128xf32>
    %51 = vector.broadcast %50 : vector<1x128xf32> to vector<128x128xf32>
    %52 = arith.addf %49, %51 : vector<128x128xf32>
    %cst_34 = arith.constant 0.000000e+00 : f32
    %53 = vector.broadcast %cst_34 : f32 to vector<128x128xf32>
    %54 = arith.maximumf %52, %53 : vector<128x128xf32>
    %55 = vector.shape_cast %54 : vector<128x128xf32> to vector<8x16x128xf32>
    %c0_35 = arith.constant 0 : index
    %c0_36 = arith.constant 0 : index
    %c0_37 = arith.constant 0 : index
    %c0_38 = arith.constant 0 : index
    %56 = vector.load %arg5[%c0_35, %c0_36, %c0_37, %c0_38] : memref<1x8x16x128xf32, #tpu.memory_space<vmem>>, vector<1x8x16x128xf32>
    %57 = vector.shape_cast %56 : vector<1x8x16x128xf32> to vector<8x16x128xf32>
    %58 = vector.shape_cast %55 : vector<8x16x128xf32> to vector<1x8x16x128xf32>
    tpu.vector_store %arg5[%c0_35, %c0_36, %c0_37, %c0_38], %58 {strides = array<i32>} : memref<1x8x16x128xf32, #tpu.memory_space<vmem>>, vector<1x8x16x128xf32>,
    return
  }
  func.func @transform_0(%arg0: i32, %arg1: i32) -> (i32, i32, i32, i32) {
    %c0_i32 = arith.constant 0 : i32
    %c0_i32_0 = arith.constant 0 : i32
    %c0_i32_1 = arith.constant 0 : i32
    %c0_i32_2 = arith.constant 0 : i32
    return %arg0, %c0_i32, %c0_i32_0, %c0_i32_1 : i32, i32, i32, i32
  }
  func.func @transform_1(%arg0: i32, %arg1: i32) -> (i32, i32) {
    %c0_i32 = arith.constant 0 : i32
    %c0_i32_0 = arith.constant 0 : i32
    %c0_i32_1 = arith.constant 0 : i32
    return %c0_i32, %c0_i32_0 : i32, i32
  }
  func.func @transform_2(%arg0: i32, %arg1: i32) -> (i32, i32) {
    %c0_i32 = arith.constant 0 : i32
    %c0_i32_0 = arith.constant 0 : i32
    %c0_i32_1 = arith.constant 0 : i32
    return %c0_i32, %c0_i32_0 : i32, i32
  }
  func.func @transform_3(%arg0: i32, %arg1: i32) -> (i32, i32, i32, i32) {
    %c0_i32 = arith.constant 0 : i32
    %c0_i32_0 = arith.constant 0 : i32
    %c0_i32_1 = arith.constant 0 : i32
    return %arg0, %arg1, %c0_i32, %c0_i32_0 : i32, i32, i32, i32
  }
}

</mosaic_0001>

<llo_original>
// kernel: tpu_custom_call.1
$region0: #{tpu_custom_call.1}
  #allocation0 [shape = 'u32[]', space=smem, size = 0x4, offset = 0x4, fixed_abs, tag = 'smem constant byte address 0x4 - core index']
  #allocation1 [shape = 'u32[144,128]{1,0:T(1,128)}', space=vmem, size = 0x12000, scoped, tag = 'internal scratch']
  %s0 = inlined_call_operand.vmem [shape: bf16[2,20,20,4], index: 0, kind: input, shape index: {}]
  %s1 = inlined_call_operand.vmem [shape: bf16[36,128], index: 1, kind: input, shape index: {}]
  %s2 = inlined_call_operand.vmem [shape: f32[1,128], index: 2, kind: input, shape index: {}]
  %s3 = inlined_call_operand.hbm [shape: f32[2,16,16,128], index: 3, kind: output, shape index: {}]
  %s4 = sld [smem:[#allocation0]]
  $region45: #{tpu_custom_call.1} parent=0
    _
  %s6 = ssub.s32 1, %s4
  %s7 = scalar_select 0, %s6, %s4
  $region1: #{tpu_custom_call.1} parent=0
    #allocation2 [shape = 'u8[131072]{0}', space=vmem, size = 0x20000, scoped, tag = 'output window, operand 0']
    #allocation3 [shape = 's32[2]{0}', space=sflag, size = 0x8, scoped, tag = 'scoped memory for tpu_custom_call.1']
    %8 = vsyncpa [#allocation3], 0
    %s9 = scalar_lea.sflag [#allocation3], 1
    %10 = vsyncpa %s9, 0
    loop: start=0, step=1, limit=6
    $region2: #{tpu_custom_call.1} parent=1 // loop_pre_header
      _
    $region3: #{tpu_custom_call.1} parent=1 // loop_header
      %s12 = sphi 0, %s16
      %p13 = scmp.ge.s32.totalorder %s12, 6
      %s19 = sphi 0, %s31
      %s20 = sphi 0, %s27
      %s21 = sphi 0, %s19
      %s22 = sphi 0, %s20
      %s23 = sphi 0, %s21
      %s24 = sphi 0, %s22
      %s34 = sphi 0, %s36
      %s37 = sphi 0, %s34
      %s38 = sphi 0, %s37
      %s54 = sphi 0, %s38
      %s58 = sphi 0, %s58
      %s60 = sphi 0, %s58
      %s61 = sphi 0, %s60
      %s75 = sphi 0, %s61
      %s79 = sphi 0, %s79
      %s81 = sphi 0, %s79
      %s82 = sphi 0, %s81
      %s96 = sphi 0, %s82
      %s104 = sphi 0, %s106
      %s107 = sphi 0, %s104
      %s108 = sphi 0, %s107
      %s124 = sphi 0, %s108
    $region4: #{tpu_custom_call.1} parent=1 // loop_header_branch
      %15 = sbr.rel (%p13) target = $region8
    $region5: #{tpu_custom_call.1} parent=1 // loop_body
      %s17 = ssub.s32 %s12, 1
      %s18 = ssub.s32 %s12, 2
      %s25 = sadd.s32 1, %s20
      %p26 = scmp.ge.s32.totalorder %s25, 2
      %s27 = scalar_select %p26, 0, %s25
      %s28 = sadd.s32 1, %s19
      %s29 = scalar_select %p26, %s28, %s19
      %p30 = scmp.ge.s32.totalorder %s29, 2
      %s31 = scalar_select %p30, 0, %s29
      %s32 = ssub.s32 %s19, %s31
      %p33 = scmp.eq.s32.totalorder %s32, 0
      %s35 = sadd.s32 %s34, 1
      %s36 = scalar_select %p33, %s34, %s35
      %p39 = pneg %p33
      %p40 = scmp.eq.s32.totalorder %s12, 3
      %p41 = por %p39, %p40
      %p42 = scmp.ne.s32.totalorder %s34, %s37
      %p43 = scmp.eq.s32.totalorder %s12, 0
      %p44 = por %p42, %p43
      %p45 = scmp.ne.s32.totalorder %s34, %s37
      %p46 = scmp.eq.s32.totalorder %s17, 3
      %p47 = por %p45, %p46
      %p48 = scmp.ne.s32.totalorder %s37, %s38
      %p49 = scmp.eq.s32.totalorder %s17, 0
      %p50 = por %p48, %p49
      %p51 = scmp.ne.s32.totalorder %s37, %s38
      %p52 = scmp.eq.s32.totalorder %s18, 3
      %p53 = por %p51, %p52
      %p55 = scmp.ne.s32.totalorder %s38, %s54
      %p56 = scmp.eq.s32.totalorder %s18, 0
      %p57 = por %p55, %p56
      %s59 = sadd.s32 %s58, 1
      %p62 = scmp.eq.s32.totalorder %s12, 3
      %p63 = scmp.ne.s32.totalorder %s58, %s60
      %p64 = scmp.eq.s32.totalorder %s12, 0
      %p65 = por %p63, %p64
      %p66 = scmp.ne.s32.totalorder %s58, %s60
      %p67 = scmp.eq.s32.totalorder %s17, 3
      %p68 = por %p66, %p67
      %p69 = scmp.ne.s32.totalorder %s60, %s61
      %p70 = scmp.eq.s32.totalorder %s17, 0
      %p71 = por %p69, %p70
      %p72 = scmp.ne.s32.totalorder %s60, %s61
      %p73 = scmp.eq.s32.totalorder %s18, 3
      %p74 = por %p72, %p73
      %p76 = scmp.ne.s32.totalorder %s61, %s75
      %p77 = scmp.eq.s32.totalorder %s18, 0
      %p78 = por %p76, %p77
      %s80 = sadd.s32 %s79, 1
      %p83 = scmp.eq.s32.totalorder %s12, 3
      %p84 = scmp.ne.s32.totalorder %s79, %s81
      %p85 = scmp.eq.s32.totalorder %s12, 0
      %p86 = por %p84, %p85
      %p87 = scmp.ne.s32.totalorder %s79, %s81
      %p88 = scmp.eq.s32.totalorder %s17, 3
      %p89 = por %p87, %p88
      %p90 = scmp.ne.s32.totalorder %s81, %s82
      %p91 = scmp.eq.s32.totalorder %s17, 0
      %p92 = por %p90, %p91
      %p93 = scmp.ne.s32.totalorder %s81, %s82
      %p94 = scmp.eq.s32.totalorder %s18, 3
      %p95 = por %p93, %p94
      %p97 = scmp.ne.s32.totalorder %s82, %s96
      %p98 = scmp.eq.s32.totalorder %s18, 0
      %p99 = por %p97, %p98
      %s100 = ssub.s32 %s19, %s31
      %s101 = ssub.s32 %s20, %s27
      %s102 = sor.u32 %s100, %s101
      %p103 = scmp.eq.s32.totalorder %s102, 0
      %s105 = sadd.s32 %s104, 1
      %s106 = scalar_select %p103, %s104, %s105
      %p109 = pneg %p103
      %p110 = scmp.eq.s32.totalorder %s12, 3
      %p111 = por %p109, %p110
      %p112 = scmp.ne.s32.totalorder %s104, %s107
      %p113 = scmp.eq.s32.totalorder %s12, 0
      %p114 = por %p112, %p113
      %p115 = scmp.ne.s32.totalorder %s104, %s107
      %p116 = scmp.eq.s32.totalorder %s17, 3
      %p117 = por %p115, %p116
      %p118 = scmp.ne.s32.totalorder %s107, %s108
      %p119 = scmp.eq.s32.totalorder %s17, 0
      %p120 = por %p118, %p119
      %p121 = scmp.ne.s32.totalorder %s107, %s108
      %p122 = scmp.eq.s32.totalorder %s18, 3
      %p123 = por %p121, %p122
      %p125 = scmp.ne.s32.totalorder %s108, %s124
      %p126 = scmp.eq.s32.totalorder %s18, 0
      %p127 = por %p125, %p126
      %p128 = scmp.le.s32.totalorder 1, %s12
      %p129 = scmp.lt.s32.totalorder %s12, 5
      %p130 = pnand %p128, %p129
      %p131 = pneg %p130
      // Predicated region
      $region9: #{tpu_custom_call.1} parent=5 // pred_check
        _
      $region10: #{tpu_custom_call.1} parent=5 // pred_check_branch
        %133 = sbr.rel (%p130) target = $region12
      $region11: #{tpu_custom_call.1} parent=5 // pred_region
        %s134 = ssub.s32 %s12, 1
        // Predicated region
        $region13: #{tpu_custom_call.1} parent=11 // pred_check
          %p135 = pneg %p71
        $region14: #{tpu_custom_call.1} parent=11 // pred_check_branch
          %137 = sbr.rel (%p135) target = $region16
        $region15: #{tpu_custom_call.1} parent=11 // pred_region
          _
        $region16: #{tpu_custom_call.1} parent=11 // pred_fallthru
          _
        // Predicated region
        $region17: #{tpu_custom_call.1} parent=11 // pred_check
          %p138 = pneg %p92
        $region18: #{tpu_custom_call.1} parent=11 // pred_check_branch
          %140 = sbr.rel (%p138) target = $region20
        $region19: #{tpu_custom_call.1} parent=11 // pred_region
          _
        $region20: #{tpu_custom_call.1} parent=11 // pred_fallthru
          _
      $region12: #{tpu_custom_call.1} parent=5 // pred_fallthru
        _
      %p141 = scmp.lt.s32.totalorder %s12, 4
      // Predicated region
      $region21: #{tpu_custom_call.1} parent=5 // pred_check
        %p142 = pneg %p141
      $region22: #{tpu_custom_call.1} parent=5 // pred_check_branch
        %144 = sbr.rel (%p142) target = $region24
      $region23: #{tpu_custom_call.1} parent=5 // pred_region
        // Predicated region
        $region25: #{tpu_custom_call.1} parent=23 // pred_check
          %p145 = pneg %p44
        $region26: #{tpu_custom_call.1} parent=23 // pred_check_branch
          %147 = sbr.rel (%p145) target = $region28
        $region27: #{tpu_custom_call.1} parent=23 // pred_region
          %p148 = scmp.lt.s32.totalorder %s19, 1
          %s149 = scalar_select %p148, %s19, 1
          %s150 = smul.addr %s149, 60
          %s151 = smul.addr %s150, 4
          %s152 = scalar_lea.vmem %s0, %s151
        $region28: #{tpu_custom_call.1} parent=23 // pred_fallthru
          _
      $region24: #{tpu_custom_call.1} parent=5 // pred_fallthru
        _
      %p153 = scmp.le.s32.totalorder 1, %s12
      %p154 = scmp.lt.s32.totalorder %s12, 5
      %p155 = pnand %p153, %p154
      %p156 = pneg %p155
      // Predicated region
      $region29: #{tpu_custom_call.1} parent=5 // pred_check
        _
      $region30: #{tpu_custom_call.1} parent=5 // pred_check_branch
        %158 = sbr.rel (%p155) target = $region32
      $region31: #{tpu_custom_call.1} parent=5 // pred_region
        %s159 = ssub.s32 %s12, 1
        %p160 = scmp.lt.s32.totalorder %s21, 1
        %s161 = scalar_select %p160, %s21, 1
        %s162 = smul.addr %s161, 60
        %s163 = smul.addr %s162, 4
        %s164 = scalar_lea.vmem %s0, %s163
        %p165 = pneg %p50
        %p166 = pneg %p47
        %p167 = pneg %p71
        %p168 = pneg %p68
        %p169 = pneg %p92
        %p170 = pneg %p89
        %p171 = pneg %p120
        %p172 = pneg %p117
        %s173 = sand.u32 %s107, 1
        %s174 = scalar_lea.sflag [#allocation3], %s173
        %s175 = sand.u32 %s107, 1
        %s176 = smul.addr %s175, 128
        %s177 = scalar_lea.vmem [#allocation2], %s176
        %p178 = scmp.lt.s32.totalorder %s21, 1
        %s179 = scalar_select %p178, %s21, 1
        %s180 = smul.addr %s179, 60
        %s181 = smul.addr %s180, 4
        %s182 = scalar_lea.vmem %s0, %s181
        %s183 = smul.u32 8, %s22
        %s185 = smul.u32 %s22, 8
        %s186 = smul.u32 %s185, 3
        %s187 = smul.addr %s186, 4
        %s188 = scalar_lea.vmem %s182, %s187
        %v189 = vld [vmem:[%s188] sm:$0xf]
        %v190 = vld [vmem:[%s188 + $0x4] sm:$0xf]
        %v191 = vld [vmem:[%s188 + $0xc] sm:$0xf]
        %v192 = vld [vmem:[%s188 + $0x10] sm:$0xf]
        %v193 = vld [vmem:[%s188 + $0x18] sm:$0xf]
        %v194 = vld [vmem:[%s188 + $0x1c] sm:$0xf]
        %v195 = vld [vmem:[%s188 + $0x24] sm:$0xf]
        %v196 = vld [vmem:[%s188 + $0x28] sm:$0xf]
        %v197 = vld [vmem:[%s188 + $0x30] sm:$0xf]
        %v198 = vld [vmem:[%s188 + $0x34] sm:$0xf]
        %v199 = vld [vmem:[%s188 + $0x3c] sm:$0xf]
        %v200 = vld [vmem:[%s188 + $0x40] sm:$0xf]
        %v201 = vld [vmem:[%s188 + $0x48] sm:$0xf]
        %v202 = vld [vmem:[%s188 + $0x4c] sm:$0xf]
        %v203 = vld [vmem:[%s188 + $0x54] sm:$0xf]
        %v204 = vld [vmem:[%s188 + $0x58] sm:$0xf]
        %v205 = vld [vmem:[%s188] sm:$0xe]
        %v206 = vld [vmem:[%s188 + $0x8] sm:$0x1]
        %v207 = vld [vmem:[%s188 + $0xc] sm:$0xe]
        %v208 = vld [vmem:[%s188 + $0x14] sm:$0x1]
        %v209 = vld [vmem:[%s188 + $0x18] sm:$0xe]
        %v210 = vld [vmem:[%s188 + $0x20] sm:$0x1]
        %v211 = vld [vmem:[%s188 + $0x24] sm:$0xe]
        %v212 = vld [vmem:[%s188 + $0x2c] sm:$0x1]
        %v213 = vld [vmem:[%s188 + $0x30] sm:$0xe]
        %v214 = vld [vmem:[%s188 + $0x38] sm:$0x1]
        %v215 = vld [vmem:[%s188 + $0x3c] sm:$0xe]
        %v216 = vld [vmem:[%s188 + $0x44] sm:$0x1]
        %v217 = vld [vmem:[%s188 + $0x48] sm:$0xe]
        %v218 = vld [vmem:[%s188 + $0x50] sm:$0x1]
        %v219 = vld [vmem:[%s188 + $0x54] sm:$0xe]
        %v220 = vld [vmem:[%s188 + $0x5c] sm:$0x1]
        %vm245 = vcmask 1042432
        %vm246 = vcmask 1046532
        %vm247 = vmor %vm245, %vm246
        %v248 = vrot.slane %v205, 5
        %v249 = vrot.slane %v248, 4
        %v250 = vrot.slane %v190, 5
        %v251 = vsel %vm247, %v249, %v250
        %v252 = vrot.slane %v250, 4
        %v253 = vrot.slane %v206, 5
        %v254 = vsel %vm247, %v252, %v253
        %v255 = vrot.slane %v207, 5
        %v256 = vrot.slane %v255, 4
        %v257 = vrot.slane %v192, 5
        %v258 = vsel %vm247, %v256, %v257
        %v259 = vrot.slane %v257, 4
        %v260 = vrot.slane %v208, 5
        %v261 = vsel %vm247, %v259, %v260
        %v262 = vrot.slane %v209, 5
        %v263 = vrot.slane %v262, 4
        %v264 = vrot.slane %v194, 5
        %v265 = vsel %vm247, %v263, %v264
        %v266 = vrot.slane %v264, 4
        %v267 = vrot.slane %v210, 5
        %v268 = vsel %vm247, %v266, %v267
        %v269 = vrot.slane %v211, 5
        %v270 = vrot.slane %v269, 4
        %v271 = vrot.slane %v196, 5
        %v272 = vsel %vm247, %v270, %v271
        %v273 = vrot.slane %v271, 4
        %v274 = vrot.slane %v212, 5
        %v275 = vsel %vm247, %v273, %v274
        %v276 = vrot.slane %v213, 5
        %v277 = vrot.slane %v276, 4
        %v278 = vrot.slane %v198, 5
        %v279 = vsel %vm247, %v277, %v278
        %v280 = vrot.slane %v278, 4
        %v281 = vrot.slane %v214, 5
        %v282 = vsel %vm247, %v280, %v281
        %v283 = vrot.slane %v215, 5
        %v284 = vrot.slane %v283, 4
        %v285 = vrot.slane %v200, 5
        %v286 = vsel %vm247, %v284, %v285
        %v287 = vrot.slane %v285, 4
        %v288 = vrot.slane %v216, 5
        %v289 = vsel %vm247, %v287, %v288
        %v290 = vrot.slane %v217, 5
        %v291 = vrot.slane %v290, 4
        %v292 = vrot.slane %v202, 5
        %v293 = vsel %vm247, %v291, %v292
        %v294 = vrot.slane %v292, 4
        %v295 = vrot.slane %v218, 5
        %v296 = vsel %vm247, %v294, %v295
        %v297 = vrot.slane %v219, 5
        %v298 = vrot.slane %v297, 4
        %v299 = vrot.slane %v204, 5
        %v300 = vsel %vm247, %v298, %v299
        %v301 = vrot.slane %v299, 4
        %v302 = vrot.slane %v220, 5
        %v303 = vsel %vm247, %v301, %v302
        %v304 = vld [vmem:[%s188] sm:$0xc]
        %v305 = vld [vmem:[%s188 + $0x8] sm:$0x3]
        %v306 = vld [vmem:[%s188 + $0xc] sm:$0xc]
        %v307 = vld [vmem:[%s188 + $0x14] sm:$0x3]
        %v308 = vld [vmem:[%s188 + $0x18] sm:$0xc]
        %v309 = vld [vmem:[%s188 + $0x20] sm:$0x3]
        %v310 = vld [vmem:[%s188 + $0x24] sm:$0xc]
        %v311 = vld [vmem:[%s188 + $0x2c] sm:$0x3]
        %v312 = vld [vmem:[%s188 + $0x30] sm:$0xc]
        %v313 = vld [vmem:[%s188 + $0x38] sm:$0x3]
        %v314 = vld [vmem:[%s188 + $0x3c] sm:$0xc]
        %v315 = vld [vmem:[%s188 + $0x44] sm:$0x3]
        %v316 = vld [vmem:[%s188 + $0x48] sm:$0xc]
        %v317 = vld [vmem:[%s188 + $0x50] sm:$0x3]
        %v318 = vld [vmem:[%s188 + $0x54] sm:$0xc]
        %v319 = vld [vmem:[%s188 + $0x5c] sm:$0x3]
        %vm336 = vcmask 1041408
        %vm337 = vcmask 1045508
        %vm338 = vmor %vm336, %vm337
        %v339 = vrot.slane %v304, 6
        %v340 = vrot.slane %v339, 4
        %v341 = vrot.slane %v190, 6
        %v342 = vsel %vm338, %v340, %v341
        %v343 = vrot.slane %v341, 4
        %v344 = vrot.slane %v305, 6
        %v345 = vsel %vm338, %v343, %v344
        %v346 = vrot.slane %v306, 6
        %v347 = vrot.slane %v346, 4
        %v348 = vrot.slane %v192, 6
        %v349 = vsel %vm338, %v347, %v348
        %v350 = vrot.slane %v348, 4
        %v351 = vrot.slane %v307, 6
        %v352 = vsel %vm338, %v350, %v351
        %v353 = vrot.slane %v308, 6
        %v354 = vrot.slane %v353, 4
        %v355 = vrot.slane %v194, 6
        %v356 = vsel %vm338, %v354, %v355
        %v357 = vrot.slane %v355, 4
        %v358 = vrot.slane %v309, 6
        %v359 = vsel %vm338, %v357, %v358
        %v360 = vrot.slane %v310, 6
        %v361 = vrot.slane %v360, 4
        %v362 = vrot.slane %v196, 6
        %v363 = vsel %vm338, %v361, %v362
        %v364 = vrot.slane %v362, 4
        %v365 = vrot.slane %v311, 6
        %v366 = vsel %vm338, %v364, %v365
        %v367 = vrot.slane %v312, 6
        %v368 = vrot.slane %v367, 4
        %v369 = vrot.slane %v198, 6
        %v370 = vsel %vm338, %v368, %v369
        %v371 = vrot.slane %v369, 4
        %v372 = vrot.slane %v313, 6
        %v373 = vsel %vm338, %v371, %v372
        %v374 = vrot.slane %v314, 6
        %v375 = vrot.slane %v374, 4
        %v376 = vrot.slane %v200, 6
        %v377 = vsel %vm338, %v375, %v376
        %v378 = vrot.slane %v376, 4
        %v379 = vrot.slane %v315, 6
        %v380 = vsel %vm338, %v378, %v379
        %v381 = vrot.slane %v316, 6
        %v382 = vrot.slane %v381, 4
        %v383 = vrot.slane %v202, 6
        %v384 = vsel %vm338, %v382, %v383
        %v385 = vrot.slane %v383, 4
        %v386 = vrot.slane %v317, 6
        %v387 = vsel %vm338, %v385, %v386
        %v388 = vrot.slane %v318, 6
        %v389 = vrot.slane %v388, 4
        %v390 = vrot.slane %v204, 6
        %v391 = vsel %vm338, %v389, %v390
        %v392 = vrot.slane %v390, 4
        %v393 = vrot.slane %v319, 6
        %v394 = vsel %vm338, %v392, %v393
        %s395 = sadd.s32 %s185, 2
        %s396 = smul.u32 %s395, 3
        %s397 = smul.addr %s396, 4
        %s398 = scalar_lea.vmem %s182, %s397
        %v399 = vld [vmem:[%s398] sm:$0xf]
        %v400 = vld [vmem:[%s398 + $0x4] sm:$0xf]
        %v401 = vld [vmem:[%s398 + $0xc] sm:$0xf]
        %v402 = vld [vmem:[%s398 + $0x10] sm:$0xf]
        %v403 = vld [vmem:[%s398 + $0x18] sm:$0xf]
        %v404 = vld [vmem:[%s398 + $0x1c] sm:$0xf]
        %v405 = vld [vmem:[%s398 + $0x24] sm:$0xf]
        %v406 = vld [vmem:[%s398 + $0x28] sm:$0xf]
        %v407 = vld [vmem:[%s398 + $0x30] sm:$0xf]
        %v408 = vld [vmem:[%s398 + $0x34] sm:$0xf]
        %v409 = vld [vmem:[%s398 + $0x3c] sm:$0xf]
        %v410 = vld [vmem:[%s398 + $0x40] sm:$0xf]
        %v411 = vld [vmem:[%s398 + $0x48] sm:$0xf]
        %v412 = vld [vmem:[%s398 + $0x4c] sm:$0xf]
        %v413 = vld [vmem:[%s398 + $0x54] sm:$0xf]
        %v414 = vld [vmem:[%s398 + $0x58] sm:$0xf]
        %v415 = vld [vmem:[%s398] sm:$0xe]
        %v416 = vld [vmem:[%s398 + $0x8] sm:$0x1]
        %v417 = vld [vmem:[%s398 + $0xc] sm:$0xe]
        %v418 = vld [vmem:[%s398 + $0x14] sm:$0x1]
        %v419 = vld [vmem:[%s398 + $0x18] sm:$0xe]
        %v420 = vld [vmem:[%s398 + $0x20] sm:$0x1]
        %v421 = vld [vmem:[%s398 + $0x24] sm:$0xe]
        %v422 = vld [vmem:[%s398 + $0x2c] sm:$0x1]
        %v423 = vld [vmem:[%s398 + $0x30] sm:$0xe]
        %v424 = vld [vmem:[%s398 + $0x38] sm:$0x1]
        %v425 = vld [vmem:[%s398 + $0x3c] sm:$0xe]
        %v426 = vld [vmem:[%s398 + $0x44] sm:$0x1]
        %v427 = vld [vmem:[%s398 + $0x48] sm:$0xe]
        %v428 = vld [vmem:[%s398 + $0x50] sm:$0x1]
        %v429 = vld [vmem:[%s398 + $0x54] sm:$0xe]
        %v430 = vld [vmem:[%s398 + $0x5c] sm:$0x1]
        %v455 = vrot.slane %v415, 5
        %v456 = vrot.slane %v455, 4
        %v457 = vrot.slane %v400, 5
        %v458 = vsel %vm247, %v456, %v457
        %v459 = vrot.slane %v457, 4
        %v460 = vrot.slane %v416, 5
        %v461 = vsel %vm247, %v459, %v460
        %v462 = vrot.slane %v417, 5
        %v463 = vrot.slane %v462, 4
        %v464 = vrot.slane %v402, 5
        %v465 = vsel %vm247, %v463, %v464
        %v466 = vrot.slane %v464, 4
        %v467 = vrot.slane %v418, 5
        %v468 = vsel %vm247, %v466, %v467
        %v469 = vrot.slane %v419, 5
        %v470 = vrot.slane %v469, 4
        %v471 = vrot.slane %v404, 5
        %v472 = vsel %vm247, %v470, %v471
        %v473 = vrot.slane %v471, 4
        %v474 = vrot.slane %v420, 5
        %v475 = vsel %vm247, %v473, %v474
        %v476 = vrot.slane %v421, 5
        %v477 = vrot.slane %v476, 4
        %v478 = vrot.slane %v406, 5
        %v479 = vsel %vm247, %v477, %v478
        %v480 = vrot.slane %v478, 4
        %v481 = vrot.slane %v422, 5
        %v482 = vsel %vm247, %v480, %v481
        %v483 = vrot.slane %v423, 5
        %v484 = vrot.slane %v483, 4
        %v485 = vrot.slane %v408, 5
        %v486 = vsel %vm247, %v484, %v485
        %v487 = vrot.slane %v485, 4
        %v488 = vrot.slane %v424, 5
        %v489 = vsel %vm247, %v487, %v488
        %v490 = vrot.slane %v425, 5
        %v491 = vrot.slane %v490, 4
        %v492 = vrot.slane %v410, 5
        %v493 = vsel %vm247, %v491, %v492
        %v494 = vrot.slane %v492, 4
        %v495 = vrot.slane %v426, 5
        %v496 = vsel %vm247, %v494, %v495
        %v497 = vrot.slane %v427, 5
        %v498 = vrot.slane %v497, 4
        %v499 = vrot.slane %v412, 5
        %v500 = vsel %vm247, %v498, %v499
        %v501 = vrot.slane %v499, 4
        %v502 = vrot.slane %v428, 5
        %v503 = vsel %vm247, %v501, %v502
        %v504 = vrot.slane %v429, 5
        %v505 = vrot.slane %v504, 4
        %v506 = vrot.slane %v414, 5
        %v507 = vsel %vm247, %v505, %v506
        %v508 = vrot.slane %v506, 4
        %v509 = vrot.slane %v430, 5
        %v510 = vsel %vm247, %v508, %v509
        %v511 = vld [vmem:[%s398] sm:$0xc]
        %v512 = vld [vmem:[%s398 + $0x8] sm:$0x3]
        %v513 = vld [vmem:[%s398 + $0xc] sm:$0xc]
        %v514 = vld [vmem:[%s398 + $0x14] sm:$0x3]
        %v515 = vld [vmem:[%s398 + $0x18] sm:$0xc]
        %v516 = vld [vmem:[%s398 + $0x20] sm:$0x3]
        %v517 = vld [vmem:[%s398 + $0x24] sm:$0xc]
        %v518 = vld [vmem:[%s398 + $0x2c] sm:$0x3]
        %v519 = vld [vmem:[%s398 + $0x30] sm:$0xc]
        %v520 = vld [vmem:[%s398 + $0x38] sm:$0x3]
        %v521 = vld [vmem:[%s398 + $0x3c] sm:$0xc]
        %v522 = vld [vmem:[%s398 + $0x44] sm:$0x3]
        %v523 = vld [vmem:[%s398 + $0x48] sm:$0xc]
        %v524 = vld [vmem:[%s398 + $0x50] sm:$0x3]
        %v525 = vld [vmem:[%s398 + $0x54] sm:$0xc]
        %v526 = vld [vmem:[%s398 + $0x5c] sm:$0x3]
        %v543 = vrot.slane %v511, 6
        %v544 = vrot.slane %v543, 4
        %v545 = vrot.slane %v400, 6
        %v546 = vsel %vm338, %v544, %v545
        %v547 = vrot.slane %v545, 4
        %v548 = vrot.slane %v512, 6
        %v549 = vsel %vm338, %v547, %v548
        %v550 = vrot.slane %v513, 6
        %v551 = vrot.slane %v550, 4
        %v552 = vrot.slane %v402, 6
        %v553 = vsel %vm338, %v551, %v552
        %v554 = vrot.slane %v552, 4
        %v555 = vrot.slane %v514, 6
        %v556 = vsel %vm338, %v554, %v555
        %v557 = vrot.slane %v515, 6
        %v558 = vrot.slane %v557, 4
        %v559 = vrot.slane %v404, 6
        %v560 = vsel %vm338, %v558, %v559
        %v561 = vrot.slane %v559, 4
        %v562 = vrot.slane %v516, 6
        %v563 = vsel %vm338, %v561, %v562
        %v564 = vrot.slane %v517, 6
        %v565 = vrot.slane %v564, 4
        %v566 = vrot.slane %v406, 6
        %v567 = vsel %vm338, %v565, %v566
        %v568 = vrot.slane %v566, 4
        %v569 = vrot.slane %v518, 6
        %v570 = vsel %vm338, %v568, %v569
        %v571 = vrot.slane %v519, 6
        %v572 = vrot.slane %v571, 4
        %v573 = vrot.slane %v408, 6
        %v574 = vsel %vm338, %v572, %v573
        %v575 = vrot.slane %v573, 4
        %v576 = vrot.slane %v520, 6
        %v577 = vsel %vm338, %v575, %v576
        %v578 = vrot.slane %v521, 6
        %v579 = vrot.slane %v578, 4
        %v580 = vrot.slane %v410, 6
        %v581 = vsel %vm338, %v579, %v580
        %v582 = vrot.slane %v580, 4
        %v583 = vrot.slane %v522, 6
        %v584 = vsel %vm338, %v582, %v583
        %v585 = vrot.slane %v523, 6
        %v586 = vrot.slane %v585, 4
        %v587 = vrot.slane %v412, 6
        %v588 = vsel %vm338, %v586, %v587
        %v589 = vrot.slane %v587, 4
        %v590 = vrot.slane %v524, 6
        %v591 = vsel %vm338, %v589, %v590
        %v592 = vrot.slane %v525, 6
        %v593 = vrot.slane %v592, 4
        %v594 = vrot.slane %v414, 6
        %v595 = vsel %vm338, %v593, %v594
        %v596 = vrot.slane %v594, 4
        %v597 = vrot.slane %v526, 6
        %v598 = vsel %vm338, %v596, %v597
        %s599 = sadd.s32 %s185, 4
        %s600 = smul.u32 %s599, 3
        %s601 = smul.addr %s600, 4
        %s602 = scalar_lea.vmem %s182, %s601
        %v603 = vld [vmem:[%s602] sm:$0xf]
        %v604 = vld [vmem:[%s602 + $0x4] sm:$0xf]
        %v605 = vld [vmem:[%s602 + $0xc] sm:$0xf]
        %v606 = vld [vmem:[%s602 + $0x10] sm:$0xf]
        %v607 = vld [vmem:[%s602 + $0x18] sm:$0xf]
        %v608 = vld [vmem:[%s602 + $0x1c] sm:$0xf]
        %v609 = vld [vmem:[%s602 + $0x24] sm:$0xf]
        %v610 = vld [vmem:[%s602 + $0x28] sm:$0xf]
        %v611 = vld [vmem:[%s602 + $0x30] sm:$0xf]
        %v612 = vld [vmem:[%s602 + $0x34] sm:$0xf]
        %v613 = vld [vmem:[%s602 + $0x3c] sm:$0xf]
        %v614 = vld [vmem:[%s602 + $0x40] sm:$0xf]
        %v615 = vld [vmem:[%s602 + $0x48] sm:$0xf]
        %v616 = vld [vmem:[%s602 + $0x4c] sm:$0xf]
        %v617 = vld [vmem:[%s602 + $0x54] sm:$0xf]
        %v618 = vld [vmem:[%s602 + $0x58] sm:$0xf]
        %v619 = vld [vmem:[%s602] sm:$0xe]
        %v620 = vld [vmem:[%s602 + $0x8] sm:$0x1]
        %v621 = vld [vmem:[%s602 + $0xc] sm:$0xe]
        %v622 = vld [vmem:[%s602 + $0x14] sm:$0x1]
        %v623 = vld [vmem:[%s602 + $0x18] sm:$0xe]
        %v624 = vld [vmem:[%s602 + $0x20] sm:$0x1]
        %v625 = vld [vmem:[%s602 + $0x24] sm:$0xe]
        %v626 = vld [vmem:[%s602 + $0x2c] sm:$0x1]
        %v627 = vld [vmem:[%s602 + $0x30] sm:$0xe]
        %v628 = vld [vmem:[%s602 + $0x38] sm:$0x1]
        %v629 = vld [vmem:[%s602 + $0x3c] sm:$0xe]
        %v630 = vld [vmem:[%s602 + $0x44] sm:$0x1]
        %v631 = vld [vmem:[%s602 + $0x48] sm:$0xe]
        %v632 = vld [vmem:[%s602 + $0x50] sm:$0x1]
        %v633 = vld [vmem:[%s602 + $0x54] sm:$0xe]
        %v634 = vld [vmem:[%s602 + $0x5c] sm:$0x1]
        %v659 = vrot.slane %v619, 5
        %v660 = vrot.slane %v659, 4
        %v661 = vrot.slane %v604, 5
        %v662 = vsel %vm247, %v660, %v661
        %v663 = vrot.slane %v661, 4
        %v664 = vrot.slane %v620, 5
        %v665 = vsel %vm247, %v663, %v664
        %v666 = vrot.slane %v621, 5
        %v667 = vrot.slane %v666, 4
        %v668 = vrot.slane %v606, 5
        %v669 = vsel %vm247, %v667, %v668
        %v670 = vrot.slane %v668, 4
        %v671 = vrot.slane %v622, 5
        %v672 = vsel %vm247, %v670, %v671
        %v673 = vrot.slane %v623, 5
        %v674 = vrot.slane %v673, 4
        %v675 = vrot.slane %v608, 5
        %v676 = vsel %vm247, %v674, %v675
        %v677 = vrot.slane %v675, 4
        %v678 = vrot.slane %v624, 5
        %v679 = vsel %vm247, %v677, %v678
        %v680 = vrot.slane %v625, 5
        %v681 = vrot.slane %v680, 4
        %v682 = vrot.slane %v610, 5
        %v683 = vsel %vm247, %v681, %v682
        %v684 = vrot.slane %v682, 4
        %v685 = vrot.slane %v626, 5
        %v686 = vsel %vm247, %v684, %v685
        %v687 = vrot.slane %v627, 5
        %v688 = vrot.slane %v687, 4
        %v689 = vrot.slane %v612, 5
        %v690 = vsel %vm247, %v688, %v689
        %v691 = vrot.slane %v689, 4
        %v692 = vrot.slane %v628, 5
        %v693 = vsel %vm247, %v691, %v692
        %v694 = vrot.slane %v629, 5
        %v695 = vrot.slane %v694, 4
        %v696 = vrot.slane %v614, 5
        %v697 = vsel %vm247, %v695, %v696
        %v698 = vrot.slane %v696, 4
        %v699 = vrot.slane %v630, 5
        %v700 = vsel %vm247, %v698, %v699
        %v701 = vrot.slane %v631, 5
        %v702 = vrot.slane %v701, 4
        %v703 = vrot.slane %v616, 5
        %v704 = vsel %vm247, %v702, %v703
        %v705 = vrot.slane %v703, 4
        %v706 = vrot.slane %v632, 5
        %v707 = vsel %vm247, %v705, %v706
        %v708 = vrot.slane %v633, 5
        %v709 = vrot.slane %v708, 4
        %v710 = vrot.slane %v618, 5
        %v711 = vsel %vm247, %v709, %v710
        %v712 = vrot.slane %v710, 4
        %v713 = vrot.slane %v634, 5
        %v714 = vsel %vm247, %v712, %v713
        %v715 = vld [vmem:[%s602] sm:$0xc]
        %v716 = vld [vmem:[%s602 + $0x8] sm:$0x3]
        %v717 = vld [vmem:[%s602 + $0xc] sm:$0xc]
        %v718 = vld [vmem:[%s602 + $0x14] sm:$0x3]
        %v719 = vld [vmem:[%s602 + $0x18] sm:$0xc]
        %v720 = vld [vmem:[%s602 + $0x20] sm:$0x3]
        %v721 = vld [vmem:[%s602 + $0x24] sm:$0xc]
        %v722 = vld [vmem:[%s602 + $0x2c] sm:$0x3]
        %v723 = vld [vmem:[%s602 + $0x30] sm:$0xc]
        %v724 = vld [vmem:[%s602 + $0x38] sm:$0x3]
        %v725 = vld [vmem:[%s602 + $0x3c] sm:$0xc]
        %v726 = vld [vmem:[%s602 + $0x44] sm:$0x3]
        %v727 = vld [vmem:[%s602 + $0x48] sm:$0xc]
        %v728 = vld [vmem:[%s602 + $0x50] sm:$0x3]
        %v729 = vld [vmem:[%s602 + $0x54] sm:$0xc]
        %v730 = vld [vmem:[%s602 + $0x5c] sm:$0x3]
        %v747 = vrot.slane %v715, 6
        %v748 = vrot.slane %v747, 4
        %v749 = vrot.slane %v604, 6
        %v750 = vsel %vm338, %v748, %v749
        %v751 = vrot.slane %v749, 4
        %v752 = vrot.slane %v716, 6
        %v753 = vsel %vm338, %v751, %v752
        %v754 = vrot.slane %v717, 6
        %v755 = vrot.slane %v754, 4
        %v756 = vrot.slane %v606, 6
        %v757 = vsel %vm338, %v755, %v756
        %v758 = vrot.slane %v756, 4
        %v759 = vrot.slane %v718, 6
        %v760 = vsel %vm338, %v758, %v759
        %v761 = vrot.slane %v719, 6
        %v762 = vrot.slane %v761, 4
        %v763 = vrot.slane %v608, 6
        %v764 = vsel %vm338, %v762, %v763
        %v765 = vrot.slane %v763, 4
        %v766 = vrot.slane %v720, 6
        %v767 = vsel %vm338, %v765, %v766
        %v768 = vrot.slane %v721, 6
        %v769 = vrot.slane %v768, 4
        %v770 = vrot.slane %v610, 6
        %v771 = vsel %vm338, %v769, %v770
        %v772 = vrot.slane %v770, 4
        %v773 = vrot.slane %v722, 6
        %v774 = vsel %vm338, %v772, %v773
        %v775 = vrot.slane %v723, 6
        %v776 = vrot.slane %v775, 4
        %v777 = vrot.slane %v612, 6
        %v778 = vsel %vm338, %v776, %v777
        %v779 = vrot.slane %v777, 4
        %v780 = vrot.slane %v724, 6
        %v781 = vsel %vm338, %v779, %v780
        %v782 = vrot.slane %v725, 6
        %v783 = vrot.slane %v782, 4
        %v784 = vrot.slane %v614, 6
        %v785 = vsel %vm338, %v783, %v784
        %v786 = vrot.slane %v784, 4
        %v787 = vrot.slane %v726, 6
        %v788 = vsel %vm338, %v786, %v787
        %v789 = vrot.slane %v727, 6
        %v790 = vrot.slane %v789, 4
        %v791 = vrot.slane %v616, 6
        %v792 = vsel %vm338, %v790, %v791
        %v793 = vrot.slane %v791, 4
        %v794 = vrot.slane %v728, 6
        %v795 = vsel %vm338, %v793, %v794
        %v796 = vrot.slane %v729, 6
        %v797 = vrot.slane %v796, 4
        %v798 = vrot.slane %v618, 6
        %v799 = vsel %vm338, %v797, %v798
        %v800 = vrot.slane %v798, 4
        %v801 = vrot.slane %v730, 6
        %v802 = vsel %vm338, %v800, %v801
        %v811 = vunpack.c.l.b16 %v189
        %v812 = vunpack.c.l.b16 %v190
        %v813 = vunpack.c.l.b16 %v191
        %v814 = vunpack.c.l.b16 %v192
        %v815 = vunpack.c.l.b16 %v193
        %v816 = vunpack.c.l.b16 %v194
        %v817 = vunpack.c.l.b16 %v195
        %v818 = vunpack.c.l.b16 %v196
        %v819 = vunpack.c.l.b16 %v197
        %v820 = vunpack.c.l.b16 %v198
        %v821 = vunpack.c.l.b16 %v199
        %v822 = vunpack.c.l.b16 %v200
        %v823 = vunpack.c.l.b16 %v201
        %v824 = vunpack.c.l.b16 %v202
        %v825 = vunpack.c.l.b16 %v203
        %v826 = vunpack.c.l.b16 %v204
        %v827 = vpack.c.b16 %v812, %v811
        %v828 = vpack.c.b16 %v814, %v813
        %v829 = vpack.c.b16 %v816, %v815
        %v830 = vpack.c.b16 %v818, %v817
        %v831 = vpack.c.b16 %v820, %v819
        %v832 = vpack.c.b16 %v822, %v821
        %v833 = vpack.c.b16 %v824, %v823
        %v834 = vpack.c.b16 %v826, %v825
        %v835 = vunpack.c.l.b16 %v251
        %v836 = vunpack.c.l.b16 %v254
        %v837 = vunpack.c.l.b16 %v258
        %v838 = vunpack.c.l.b16 %v261
        %v839 = vunpack.c.l.b16 %v265
        %v840 = vunpack.c.l.b16 %v268
        %v841 = vunpack.c.l.b16 %v272
        %v842 = vunpack.c.l.b16 %v275
        %v843 = vunpack.c.l.b16 %v279
        %v844 = vunpack.c.l.b16 %v282
        %v845 = vunpack.c.l.b16 %v286
        %v846 = vunpack.c.l.b16 %v289
        %v847 = vunpack.c.l.b16 %v293
        %v848 = vunpack.c.l.b16 %v296
        %v849 = vunpack.c.l.b16 %v300
        %v850 = vunpack.c.l.b16 %v303
        %v851 = vpack.c.b16 %v836, %v835
        %v852 = vpack.c.b16 %v838, %v837
        %v853 = vpack.c.b16 %v840, %v839
        %v854 = vpack.c.b16 %v842, %v841
        %v855 = vpack.c.b16 %v844, %v843
        %v856 = vpack.c.b16 %v846, %v845
        %v857 = vpack.c.b16 %v848, %v847
        %v858 = vpack.c.b16 %v850, %v849
        %859 = vrot.lane.b32.xlu0 %v851, 4
        %v860 = vpop.permute.xlu0 %859
        %861 = vrot.lane.b32.xlu0 %v852, 4
        %v862 = vpop.permute.xlu0 %861
        %863 = vrot.lane.b32.xlu0 %v853, 4
        %v864 = vpop.permute.xlu0 %863
        %865 = vrot.lane.b32.xlu0 %v854, 4
        %v866 = vpop.permute.xlu0 %865
        %867 = vrot.lane.b32.xlu0 %v855, 4
        %v868 = vpop.permute.xlu0 %867
        %869 = vrot.lane.b32.xlu0 %v856, 4
        %v870 = vpop.permute.xlu0 %869
        %871 = vrot.lane.b32.xlu0 %v857, 4
        %v872 = vpop.permute.xlu0 %871
        %873 = vrot.lane.b32.xlu0 %v858, 4
        %v874 = vpop.permute.xlu0 %873
        %v875 = vunpack.c.l.b16 %v342
        %v876 = vunpack.c.l.b16 %v345
        %v877 = vunpack.c.l.b16 %v349
        %v878 = vunpack.c.l.b16 %v352
        %v879 = vunpack.c.l.b16 %v356
        %v880 = vunpack.c.l.b16 %v359
        %v881 = vunpack.c.l.b16 %v363
        %v882 = vunpack.c.l.b16 %v366
        %v883 = vunpack.c.l.b16 %v370
        %v884 = vunpack.c.l.b16 %v373
        %v885 = vunpack.c.l.b16 %v377
        %v886 = vunpack.c.l.b16 %v380
        %v887 = vunpack.c.l.b16 %v384
        %v888 = vunpack.c.l.b16 %v387
        %v889 = vunpack.c.l.b16 %v391
        %v890 = vunpack.c.l.b16 %v394
        %v891 = vpack.c.b16 %v876, %v875
        %v892 = vpack.c.b16 %v878, %v877
        %v893 = vpack.c.b16 %v880, %v879
        %v894 = vpack.c.b16 %v882, %v881
        %v895 = vpack.c.b16 %v884, %v883
        %v896 = vpack.c.b16 %v886, %v885
        %v897 = vpack.c.b16 %v888, %v887
        %v898 = vpack.c.b16 %v890, %v889
        %899 = vrot.lane.b32.xlu0 %v891, 8
        %v900 = vpop.permute.xlu0 %899
        %901 = vrot.lane.b32.xlu0 %v892, 8
        %v902 = vpop.permute.xlu0 %901
        %903 = vrot.lane.b32.xlu0 %v893, 8
        %v904 = vpop.permute.xlu0 %903
        %905 = vrot.lane.b32.xlu0 %v894, 8
        %v906 = vpop.permute.xlu0 %905
        %907 = vrot.lane.b32.xlu0 %v895, 8
        %v908 = vpop.permute.xlu0 %907
        %909 = vrot.lane.b32.xlu0 %v896, 8
        %v910 = vpop.permute.xlu0 %909
        %911 = vrot.lane.b32.xlu0 %v897, 8
        %v912 = vpop.permute.xlu0 %911
        %913 = vrot.lane.b32.xlu0 %v898, 8
        %v914 = vpop.permute.xlu0 %913
        %v923 = vunpack.c.l.b16 %v399
        %v924 = vunpack.c.l.b16 %v400
        %v925 = vunpack.c.l.b16 %v401
        %v926 = vunpack.c.l.b16 %v402
        %v927 = vunpack.c.l.b16 %v403
        %v928 = vunpack.c.l.b16 %v404
        %v929 = vunpack.c.l.b16 %v405
        %v930 = vunpack.c.l.b16 %v406
        %v931 = vunpack.c.l.b16 %v407
        %v932 = vunpack.c.l.b16 %v408
        %v933 = vunpack.c.l.b16 %v409
        %v934 = vunpack.c.l.b16 %v410
        %v935 = vunpack.c.l.b16 %v411
        %v936 = vunpack.c.l.b16 %v412
        %v937 = vunpack.c.l.b16 %v413
        %v938 = vunpack.c.l.b16 %v414
        %v939 = vpack.c.b16 %v924, %v923
        %v940 = vpack.c.b16 %v926, %v925
        %v941 = vpack.c.b16 %v928, %v927
        %v942 = vpack.c.b16 %v930, %v929
        %v943 = vpack.c.b16 %v932, %v931
        %v944 = vpack.c.b16 %v934, %v933
        %v945 = vpack.c.b16 %v936, %v935
        %v946 = vpack.c.b16 %v938, %v937
        %947 = vrot.lane.b32.xlu0 %v939, 12
        %v948 = vpop.permute.xlu0 %947
        %949 = vrot.lane.b32.xlu0 %v940, 12
        %v950 = vpop.permute.xlu0 %949
        %951 = vrot.lane.b32.xlu0 %v941, 12
        %v952 = vpop.permute.xlu0 %951
        %953 = vrot.lane.b32.xlu0 %v942, 12
        %v954 = vpop.permute.xlu0 %953
        %955 = vrot.lane.b32.xlu0 %v943, 12
        %v956 = vpop.permute.xlu0 %955
        %957 = vrot.lane.b32.xlu0 %v944, 12
        %v958 = vpop.permute.xlu0 %957
        %959 = vrot.lane.b32.xlu0 %v945, 12
        %v960 = vpop.permute.xlu0 %959
        %961 = vrot.lane.b32.xlu0 %v946, 12
        %v962 = vpop.permute.xlu0 %961
        %v963 = vunpack.c.l.b16 %v458
        %v964 = vunpack.c.l.b16 %v461
        %v965 = vunpack.c.l.b16 %v465
        %v966 = vunpack.c.l.b16 %v468
        %v967 = vunpack.c.l.b16 %v472
        %v968 = vunpack.c.l.b16 %v475
        %v969 = vunpack.c.l.b16 %v479
        %v970 = vunpack.c.l.b16 %v482
        %v971 = vunpack.c.l.b16 %v486
        %v972 = vunpack.c.l.b16 %v489
        %v973 = vunpack.c.l.b16 %v493
        %v974 = vunpack.c.l.b16 %v496
        %v975 = vunpack.c.l.b16 %v500
        %v976 = vunpack.c.l.b16 %v503
        %v977 = vunpack.c.l.b16 %v507
        %v978 = vunpack.c.l.b16 %v510
        %v979 = vpack.c.b16 %v964, %v963
        %v980 = vpack.c.b16 %v966, %v965
        %v981 = vpack.c.b16 %v968, %v967
        %v982 = vpack.c.b16 %v970, %v969
        %v983 = vpack.c.b16 %v972, %v971
        %v984 = vpack.c.b16 %v974, %v973
        %v985 = vpack.c.b16 %v976, %v975
        %v986 = vpack.c.b16 %v978, %v977
        %987 = vrot.lane.b32.xlu0 %v979, 16
        %v988 = vpop.permute.xlu0 %987
        %989 = vrot.lane.b32.xlu0 %v980, 16
        %v990 = vpop.permute.xlu0 %989
        %991 = vrot.lane.b32.xlu0 %v981, 16
        %v992 = vpop.permute.xlu0 %991
        %993 = vrot.lane.b32.xlu0 %v982, 16
        %v994 = vpop.permute.xlu0 %993
        %995 = vrot.lane.b32.xlu0 %v983, 16
        %v996 = vpop.permute.xlu0 %995
        %997 = vrot.lane.b32.xlu0 %v984, 16
        %v998 = vpop.permute.xlu0 %997
        %999 = vrot.lane.b32.xlu0 %v985, 16
        %v1000 = vpop.permute.xlu0 %999
        %1001 = vrot.lane.b32.xlu0 %v986, 16
        %v1002 = vpop.permute.xlu0 %1001
        %v1003 = vunpack.c.l.b16 %v546
        %v1004 = vunpack.c.l.b16 %v549
        %v1005 = vunpack.c.l.b16 %v553
        %v1006 = vunpack.c.l.b16 %v556
        %v1007 = vunpack.c.l.b16 %v560
        %v1008 = vunpack.c.l.b16 %v563
        %v1009 = vunpack.c.l.b16 %v567
        %v1010 = vunpack.c.l.b16 %v570
        %v1011 = vunpack.c.l.b16 %v574
        %v1012 = vunpack.c.l.b16 %v577
        %v1013 = vunpack.c.l.b16 %v581
        %v1014 = vunpack.c.l.b16 %v584
        %v1015 = vunpack.c.l.b16 %v588
        %v1016 = vunpack.c.l.b16 %v591
        %v1017 = vunpack.c.l.b16 %v595
        %v1018 = vunpack.c.l.b16 %v598
        %v1019 = vpack.c.b16 %v1004, %v1003
        %v1020 = vpack.c.b16 %v1006, %v1005
        %v1021 = vpack.c.b16 %v1008, %v1007
        %v1022 = vpack.c.b16 %v1010, %v1009
        %v1023 = vpack.c.b16 %v1012, %v1011
        %v1024 = vpack.c.b16 %v1014, %v1013
        %v1025 = vpack.c.b16 %v1016, %v1015
        %v1026 = vpack.c.b16 %v1018, %v1017
        %1027 = vrot.lane.b32.xlu0 %v1019, 20
        %v1028 = vpop.permute.xlu0 %1027
        %1029 = vrot.lane.b32.xlu0 %v1020, 20
        %v1030 = vpop.permute.xlu0 %1029
        %1031 = vrot.lane.b32.xlu0 %v1021, 20
        %v1032 = vpop.permute.xlu0 %1031
        %1033 = vrot.lane.b32.xlu0 %v1022, 20
        %v1034 = vpop.permute.xlu0 %1033
        %1035 = vrot.lane.b32.xlu0 %v1023, 20
        %v1036 = vpop.permute.xlu0 %1035
        %1037 = vrot.lane.b32.xlu0 %v1024, 20
        %v1038 = vpop.permute.xlu0 %1037
        %1039 = vrot.lane.b32.xlu0 %v1025, 20
        %v1040 = vpop.permute.xlu0 %1039
        %1041 = vrot.lane.b32.xlu0 %v1026, 20
        %v1042 = vpop.permute.xlu0 %1041
        %v1051 = vunpack.c.l.b16 %v603
        %v1052 = vunpack.c.l.b16 %v604
        %v1053 = vunpack.c.l.b16 %v605
        %v1054 = vunpack.c.l.b16 %v606
        %v1055 = vunpack.c.l.b16 %v607
        %v1056 = vunpack.c.l.b16 %v608
        %v1057 = vunpack.c.l.b16 %v609
        %v1058 = vunpack.c.l.b16 %v610
        %v1059 = vunpack.c.l.b16 %v611
        %v1060 = vunpack.c.l.b16 %v612
        %v1061 = vunpack.c.l.b16 %v613
        %v1062 = vunpack.c.l.b16 %v614
        %v1063 = vunpack.c.l.b16 %v615
        %v1064 = vunpack.c.l.b16 %v616
        %v1065 = vunpack.c.l.b16 %v617
        %v1066 = vunpack.c.l.b16 %v618
        %v1067 = vpack.c.b16 %v1052, %v1051
        %v1068 = vpack.c.b16 %v1054, %v1053
        %v1069 = vpack.c.b16 %v1056, %v1055
        %v1070 = vpack.c.b16 %v1058, %v1057
        %v1071 = vpack.c.b16 %v1060, %v1059
        %v1072 = vpack.c.b16 %v1062, %v1061
        %v1073 = vpack.c.b16 %v1064, %v1063
        %v1074 = vpack.c.b16 %v1066, %v1065
        %1075 = vrot.lane.b32.xlu0 %v1067, 24
        %v1076 = vpop.permute.xlu0 %1075
        %1077 = vrot.lane.b32.xlu0 %v1068, 24
        %v1078 = vpop.permute.xlu0 %1077
        %1079 = vrot.lane.b32.xlu0 %v1069, 24
        %v1080 = vpop.permute.xlu0 %1079
        %1081 = vrot.lane.b32.xlu0 %v1070, 24
        %v1082 = vpop.permute.xlu0 %1081
        %1083 = vrot.lane.b32.xlu0 %v1071, 24
        %v1084 = vpop.permute.xlu0 %1083
        %1085 = vrot.lane.b32.xlu0 %v1072, 24
        %v1086 = vpop.permute.xlu0 %1085
        %1087 = vrot.lane.b32.xlu0 %v1073, 24
        %v1088 = vpop.permute.xlu0 %1087
        %1089 = vrot.lane.b32.xlu0 %v1074, 24
        %v1090 = vpop.permute.xlu0 %1089
        %v1091 = vunpack.c.l.b16 %v662
        %v1092 = vunpack.c.l.b16 %v665
        %v1093 = vunpack.c.l.b16 %v669
        %v1094 = vunpack.c.l.b16 %v672
        %v1095 = vunpack.c.l.b16 %v676
        %v1096 = vunpack.c.l.b16 %v679
        %v1097 = vunpack.c.l.b16 %v683
        %v1098 = vunpack.c.l.b16 %v686
        %v1099 = vunpack.c.l.b16 %v690
        %v1100 = vunpack.c.l.b16 %v693
        %v1101 = vunpack.c.l.b16 %v697
        %v1102 = vunpack.c.l.b16 %v700
        %v1103 = vunpack.c.l.b16 %v704
        %v1104 = vunpack.c.l.b16 %v707
        %v1105 = vunpack.c.l.b16 %v711
        %v1106 = vunpack.c.l.b16 %v714
        %v1107 = vpack.c.b16 %v1092, %v1091
        %v1108 = vpack.c.b16 %v1094, %v1093
        %v1109 = vpack.c.b16 %v1096, %v1095
        %v1110 = vpack.c.b16 %v1098, %v1097
        %v1111 = vpack.c.b16 %v1100, %v1099
        %v1112 = vpack.c.b16 %v1102, %v1101
        %v1113 = vpack.c.b16 %v1104, %v1103
        %v1114 = vpack.c.b16 %v1106, %v1105
        %1115 = vrot.lane.b32.xlu0 %v1107, 28
        %v1116 = vpop.permute.xlu0 %1115
        %1117 = vrot.lane.b32.xlu0 %v1108, 28
        %v1118 = vpop.permute.xlu0 %1117
        %1119 = vrot.lane.b32.xlu0 %v1109, 28
        %v1120 = vpop.permute.xlu0 %1119
        %1121 = vrot.lane.b32.xlu0 %v1110, 28
        %v1122 = vpop.permute.xlu0 %1121
        %1123 = vrot.lane.b32.xlu0 %v1111, 28
        %v1124 = vpop.permute.xlu0 %1123
        %1125 = vrot.lane.b32.xlu0 %v1112, 28
        %v1126 = vpop.permute.xlu0 %1125
        %1127 = vrot.lane.b32.xlu0 %v1113, 28
        %v1128 = vpop.permute.xlu0 %1127
        %1129 = vrot.lane.b32.xlu0 %v1114, 28
        %v1130 = vpop.permute.xlu0 %1129
        %v1131 = vunpack.c.l.b16 %v750
        %v1132 = vunpack.c.l.b16 %v753
        %v1133 = vunpack.c.l.b16 %v757
        %v1134 = vunpack.c.l.b16 %v760
        %v1135 = vunpack.c.l.b16 %v764
        %v1136 = vunpack.c.l.b16 %v767
        %v1137 = vunpack.c.l.b16 %v771
        %v1138 = vunpack.c.l.b16 %v774
        %v1139 = vunpack.c.l.b16 %v778
        %v1140 = vunpack.c.l.b16 %v781
        %v1141 = vunpack.c.l.b16 %v785
        %v1142 = vunpack.c.l.b16 %v788
        %v1143 = vunpack.c.l.b16 %v792
        %v1144 = vunpack.c.l.b16 %v795
        %v1145 = vunpack.c.l.b16 %v799
        %v1146 = vunpack.c.l.b16 %v802
        %v1147 = vpack.c.b16 %v1132, %v1131
        %v1148 = vpack.c.b16 %v1134, %v1133
        %v1149 = vpack.c.b16 %v1136, %v1135
        %v1150 = vpack.c.b16 %v1138, %v1137
        %v1151 = vpack.c.b16 %v1140, %v1139
        %v1152 = vpack.c.b16 %v1142, %v1141
        %v1153 = vpack.c.b16 %v1144, %v1143
        %v1154 = vpack.c.b16 %v1146, %v1145
        %1155 = vrot.lane.b32.xlu0 %v1147, 32
        %v1156 = vpop.permute.xlu0 %1155
        %1157 = vrot.lane.b32.xlu0 %v1148, 32
        %v1158 = vpop.permute.xlu0 %1157
        %1159 = vrot.lane.b32.xlu0 %v1149, 32
        %v1160 = vpop.permute.xlu0 %1159
        %1161 = vrot.lane.b32.xlu0 %v1150, 32
        %v1162 = vpop.permute.xlu0 %1161
        %1163 = vrot.lane.b32.xlu0 %v1151, 32
        %v1164 = vpop.permute.xlu0 %1163
        %1165 = vrot.lane.b32.xlu0 %v1152, 32
        %v1166 = vpop.permute.xlu0 %1165
        %1167 = vrot.lane.b32.xlu0 %v1153, 32
        %v1168 = vpop.permute.xlu0 %1167
        %1169 = vrot.lane.b32.xlu0 %v1154, 32
        %v1170 = vpop.permute.xlu0 %1169
        %vm1171 = vcmask 31744
        %v1174 = vsel %vm1171, %v827, %v860
        %v1177 = vsel %vm1171, %v828, %v862
        %v1180 = vsel %vm1171, %v829, %v864
        %v1183 = vsel %vm1171, %v830, %v866
        %v1186 = vsel %vm1171, %v831, %v868
        %v1189 = vsel %vm1171, %v832, %v870
        %v1192 = vsel %vm1171, %v833, %v872
        %v1195 = vsel %vm1171, %v834, %v874
        %vm1196 = vcmask 64512
        %v1198 = vsel %vm1196, %v1174, %v900
        %v1200 = vsel %vm1196, %v1177, %v902
        %v1202 = vsel %vm1196, %v1180, %v904
        %v1204 = vsel %vm1196, %v1183, %v906
        %v1206 = vsel %vm1196, %v1186, %v908
        %v1208 = vsel %vm1196, %v1189, %v910
        %v1210 = vsel %vm1196, %v1192, %v912
        %v1212 = vsel %vm1196, %v1195, %v914
        %vm1213 = vcmask 97280
        %v1215 = vsel %vm1213, %v1198, %v948
        %v1217 = vsel %vm1213, %v1200, %v950
        %v1219 = vsel %vm1213, %v1202, %v952
        %v1221 = vsel %vm1213, %v1204, %v954
        %v1223 = vsel %vm1213, %v1206, %v956
        %v1225 = vsel %vm1213, %v1208, %v958
        %v1227 = vsel %vm1213, %v1210, %v960
        %v1229 = vsel %vm1213, %v1212, %v962
        %vm1230 = vcmask 130048
        %v1232 = vsel %vm1230, %v1215, %v988
        %v1234 = vsel %vm1230, %v1217, %v990
        %v1236 = vsel %vm1230, %v1219, %v992
        %v1238 = vsel %vm1230, %v1221, %v994
        %v1240 = vsel %vm1230, %v1223, %v996
        %v1242 = vsel %vm1230, %v1225, %v998
        %v1244 = vsel %vm1230, %v1227, %v1000
        %v1246 = vsel %vm1230, %v1229, %v1002
        %vm1247 = vcmask 162816
        %v1249 = vsel %vm1247, %v1232, %v1028
        %v1251 = vsel %vm1247, %v1234, %v1030
        %v1253 = vsel %vm1247, %v1236, %v1032
        %v1255 = vsel %vm1247, %v1238, %v1034
        %v1257 = vsel %vm1247, %v1240, %v1036
        %v1259 = vsel %vm1247, %v1242, %v1038
        %v1261 = vsel %vm1247, %v1244, %v1040
        %v1263 = vsel %vm1247, %v1246, %v1042
        %vm1264 = vcmask 195584
        %v1266 = vsel %vm1264, %v1249, %v1076
        %v1268 = vsel %vm1264, %v1251, %v1078
        %v1270 = vsel %vm1264, %v1253, %v1080
        %v1272 = vsel %vm1264, %v1255, %v1082
        %v1274 = vsel %vm1264, %v1257, %v1084
        %v1276 = vsel %vm1264, %v1259, %v1086
        %v1278 = vsel %vm1264, %v1261, %v1088
        %v1280 = vsel %vm1264, %v1263, %v1090
        %vm1281 = vcmask 228352
        %v1283 = vsel %vm1281, %v1266, %v1116
        %v1285 = vsel %vm1281, %v1268, %v1118
        %v1287 = vsel %vm1281, %v1270, %v1120
        %v1289 = vsel %vm1281, %v1272, %v1122
        %v1291 = vsel %vm1281, %v1274, %v1124
        %v1293 = vsel %vm1281, %v1276, %v1126
        %v1295 = vsel %vm1281, %v1278, %v1128
        %v1297 = vsel %vm1281, %v1280, %v1130
        %vm1298 = vcmask 261120
        %v1300 = vsel %vm1298, %v1283, %v1156
        %v1302 = vsel %vm1298, %v1285, %v1158
        %v1304 = vsel %vm1298, %v1287, %v1160
        %v1306 = vsel %vm1298, %v1289, %v1162
        %v1308 = vsel %vm1298, %v1291, %v1164
        %v1310 = vsel %vm1298, %v1293, %v1166
        %v1312 = vsel %vm1298, %v1295, %v1168
        %v1314 = vsel %vm1298, %v1297, %v1170
        %v1315 = vld [vmem:[%s1] sm:$0xf]
        %v1316 = vld [vmem:[%s1 + $0x4] sm:$0xf]
        %v1317 = vld [vmem:[%s1 + $0x8] sm:$0xf]
        %v1318 = vld [vmem:[%s1 + $0xc] sm:$0xf]
        %v1319 = vld [vmem:[%s1 + $0x10] sm:$0x3]
        %v1320 = vld [vmem:[%s2] sm:$0x1]
        %v1322 = vlaneseq
        %v1323 = vshrl.u32 %v1322, 7
        %v1324 = vsub.s32 0, %v1323
        %v1325 = vrot.slane %v1320, %v1324
        %v1332 = vunpack.c.l.b16 %v1315
        %v1333 = vunpack.c.l.b16 %v1316
        %v1334 = vunpack.c.l.b16 %v1317
        %v1335 = vunpack.c.l.b16 %v1318
        %v1336 = vunpack.c.l.b16 %v1319
        %v1337 = vpack.c.b16 %v1333, %v1332
        %v1338 = vpack.c.b16 %v1335, %v1334
        %v1339 = vpack.c.b16 %v1336, %v1336
        %vm1342 = vcmask 293888
        %v1343 = vsel %vm1342, %v1300, 0
        %v1345 = vsel %vm1342, %v1302, 0
        %v1347 = vsel %vm1342, %v1304, 0
        %v1349 = vsel %vm1342, %v1306, 0
        %v1351 = vsel %vm1342, %v1308, 0
        %v1353 = vsel %vm1342, %v1310, 0
        %v1355 = vsel %vm1342, %v1312, 0
        %v1357 = vsel %vm1342, %v1314, 0
        %vm1359 = vcmask 1041408
        %v1361 = vsel %vm1359, %v1339, 0
        %1363 = vmatprep.subr.bf16.mxu0 0
        %1364 = vmatpush1.bf16.msra.mxu0 %v1337
        %1365 = vmatprep.subr.bf16.mxu0 0
        %1366 = vmatpush1.bf16.msra.mxu0 %v1338
        %1367 = vmatprep.subr.bf16.mxu0 0
        %1368 = vmatpush1.bf16.msra.mxu0 %v1361
        %1369 = vmatprep.subr.bf16.mxu0 0
        %1370 = vmatpush1.bf16.msra.mxu0 0
        %1371 = vmatprep.subr.bf16.mxu0 0
        %1372 = vmatpush1.bf16.msra.mxu0 0
        %1373 = vmatprep.subr.bf16.mxu0 0
        %1374 = vmatpush1.bf16.msra.mxu0 0
        %1375 = vmatprep.subr.bf16.mxu0 0
        %1376 = vmatpush1.bf16.msra.mxu0 0
        %1377 = vmatprep.subr.bf16.mxu0 0
        %1378 = vmatpush1.bf16.msra.mxu0 0
        %1379 = vmatprep.subr.bf16.mxu0 0
        %1380 = vmatpush1.bf16.msra.mxu0 0
        %1381 = vmatprep.subr.bf16.mxu0 0
        %1382 = vmatpush1.bf16.msra.mxu0 0
        %1383 = vmatprep.subr.bf16.mxu0 0
        %1384 = vmatpush1.bf16.msra.mxu0 0
        %1385 = vmatprep.subr.bf16.mxu0 0
        %1386 = vmatpush1.bf16.msra.mxu0 0
        %1387 = vmatprep.subr.bf16.mxu0 0
        %1388 = vmatpush1.bf16.msra.mxu0 0
        %1389 = vmatprep.subr.bf16.mxu0 0
        %1390 = vmatpush1.bf16.msra.mxu0 0
        %1391 = vmatprep.subr.bf16.mxu0 0
        %1392 = vmatpush1.bf16.msra.mxu0 0
        %1393 = vmatprep.subr.bf16.mxu0 0
        %1394 = vmatpush1.bf16.msra.mxu0 0
        %1395 = vmatprep.mubr.bf16.mxu0 0
        %1396 = vmatmul.mubr.bf16.gmra.mrb[0].mxu0 %v1343
        %v1397 = vpop.f32.mrb[0].mxu0
        %v1398 = vadd.f32 %v1325, %v1397
        %v1399 = vpop.f32.mrb[0].mxu0
        %v1400 = vpop.f32.mrb[0].mxu0
        %v1401 = vadd.f32 %v1325, %v1400
        %v1402 = vpop.f32.mrb[0].mxu0
        %1403 = vmatprep.mubr.bf16.mxu0 0
        %1404 = vmatmul.mubr.bf16.gmra.mrb[0].mxu0 %v1345
        %v1405 = vpop.f32.mrb[0].mxu0
        %v1406 = vadd.f32 %v1325, %v1405
        %v1407 = vpop.f32.mrb[0].mxu0
        %v1408 = vpop.f32.mrb[0].mxu0
        %v1409 = vadd.f32 %v1325, %v1408
        %v1410 = vpop.f32.mrb[0].mxu0
        %1411 = vmatprep.mubr.bf16.mxu0 0
        %1412 = vmatmul.mubr.bf16.gmra.mrb[0].mxu0 %v1347
        %v1413 = vpop.f32.mrb[0].mxu0
        %v1414 = vadd.f32 %v1325, %v1413
        %v1415 = vpop.f32.mrb[0].mxu0
        %v1416 = vpop.f32.mrb[0].mxu0
        %v1417 = vadd.f32 %v1325, %v1416
        %v1418 = vpop.f32.mrb[0].mxu0
        %1419 = vmatprep.mubr.bf16.mxu0 0
        %1420 = vmatmul.mubr.bf16.gmra.mrb[0].mxu0 %v1349
        %v1421 = vpop.f32.mrb[0].mxu0
        %v1422 = vadd.f32 %v1325, %v1421
        %v1423 = vpop.f32.mrb[0].mxu0
        %v1424 = vpop.f32.mrb[0].mxu0
        %v1425 = vadd.f32 %v1325, %v1424
        %v1426 = vpop.f32.mrb[0].mxu0
        %1427 = vmatprep.mubr.bf16.mxu0 0
        %1428 = vmatmul.mubr.bf16.gmra.mrb[0].mxu0 %v1351
        %v1429 = vpop.f32.mrb[0].mxu0
        %v1430 = vadd.f32 %v1325, %v1429
        %v1431 = vpop.f32.mrb[0].mxu0
        %v1432 = vpop.f32.mrb[0].mxu0
        %v1433 = vadd.f32 %v1325, %v1432
        %v1434 = vpop.f32.mrb[0].mxu0
        %1435 = vmatprep.mubr.bf16.mxu0 0
        %1436 = vmatmul.mubr.bf16.gmra.mrb[0].mxu0 %v1353
        %v1437 = vpop.f32.mrb[0].mxu0
        %v1438 = vadd.f32 %v1325, %v1437
        %v1439 = vpop.f32.mrb[0].mxu0
        %v1440 = vpop.f32.mrb[0].mxu0
        %v1441 = vadd.f32 %v1325, %v1440
        %v1442 = vpop.f32.mrb[0].mxu0
        %1443 = vmatprep.mubr.bf16.mxu0 0
        %1444 = vmatmul.mubr.bf16.gmra.mrb[0].mxu0 %v1355
        %v1445 = vpop.f32.mrb[0].mxu0
        %v1446 = vadd.f32 %v1325, %v1445
        %v1447 = vpop.f32.mrb[0].mxu0
        %v1448 = vpop.f32.mrb[0].mxu0
        %v1449 = vadd.f32 %v1325, %v1448
        %v1450 = vpop.f32.mrb[0].mxu0
        %1451 = vmatprep.mubr.bf16.mxu0 0
        %1452 = vmatmul.mubr.bf16.gmra.mrb[0].mxu0 %v1357
        %v1453 = vpop.f32.mrb[0].mxu0
        %v1454 = vadd.f32 %v1325, %v1453
        %v1455 = vpop.f32.mrb[0].mxu0
        %v1456 = vpop.f32.mrb[0].mxu0
        %v1457 = vadd.f32 %v1325, %v1456
        %v1458 = vpop.f32.mrb[0].mxu0
        %1459 = vdwg.mxu0
        %v1460 = vmax.f32 %v1398, 0.0
        %v1461 = vmax.f32 %v1401, 0.0
        %v1462 = vmax.f32 %v1406, 0.0
        %v1463 = vmax.f32 %v1409, 0.0
        %v1464 = vmax.f32 %v1414, 0.0
        %v1465 = vmax.f32 %v1417, 0.0
        %v1466 = vmax.f32 %v1422, 0.0
        %v1467 = vmax.f32 %v1425, 0.0
        %v1468 = vmax.f32 %v1430, 0.0
        %v1469 = vmax.f32 %v1433, 0.0
        %v1470 = vmax.f32 %v1438, 0.0
        %v1471 = vmax.f32 %v1441, 0.0
        %v1472 = vmax.f32 %v1446, 0.0
        %v1473 = vmax.f32 %v1449, 0.0
        %v1474 = vmax.f32 %v1454, 0.0
        %v1475 = vmax.f32 %v1457, 0.0
        %1476 = vst [vmem:[%s177] sm:$0xff] %v1460
        %1477 = vst [vmem:[%s177 + $0x8] sm:$0xff] %v1461
        %1478 = vst [vmem:[%s177 + $0x10] sm:$0xff] %v1462
        %1479 = vst [vmem:[%s177 + $0x18] sm:$0xff] %v1463
        %1480 = vst [vmem:[%s177 + $0x20] sm:$0xff] %v1464
        %1481 = vst [vmem:[%s177 + $0x28] sm:$0xff] %v1465
        %1482 = vst [vmem:[%s177 + $0x30] sm:$0xff] %v1466
        %1483 = vst [vmem:[%s177 + $0x38] sm:$0xff] %v1467
        %1484 = vst [vmem:[%s177 + $0x40] sm:$0xff] %v1468
        %1485 = vst [vmem:[%s177 + $0x48] sm:$0xff] %v1469
        %1486 = vst [vmem:[%s177 + $0x50] sm:$0xff] %v1470
        %1487 = vst [vmem:[%s177 + $0x58] sm:$0xff] %v1471
        %1488 = vst [vmem:[%s177 + $0x60] sm:$0xff] %v1472
        %1489 = vst [vmem:[%s177 + $0x68] sm:$0xff] %v1473
        %1490 = vst [vmem:[%s177 + $0x70] sm:$0xff] %v1474
        %1491 = vst [vmem:[%s177 + $0x78] sm:$0xff] %v1475
        %s1492 = sand.u32 %s107, 1
        %s1493 = scalar_lea.sflag [#allocation3], %s1492
        %s1494 = sand.u32 %s107, 1
        %s1495 = smul.addr %s1494, 128
        %s1496 = scalar_lea.vmem [#allocation2], %s1495
        // Predicated region
        $region33: #{tpu_custom_call.1} parent=31 // pred_check
          %p1497 = pneg %p117
        $region34: #{tpu_custom_call.1} parent=31 // pred_check_branch
          %1499 = sbr.rel (%p1497) target = $region36
        $region35: #{tpu_custom_call.1} parent=31 // pred_region
          %s1500 = smul.u32 8, %s22
          %s1502 = ssub.s32 2048, 2048
          %1503 = vsyncadd %s1493, %s1502
          %s1504 = smul.addr %s1500, 2
          %s1505 = smul.addr %s21, 32
          %s1506 = sadd.s32 %s1504, %s1505
          %s1507 = smul.addr %s1506, 128
          %s1508 = scalar_lea.hbm %s3, %s1507
          %s1509 = sshll.u32 %s1496, 4
          %s1510 = int_to_ptr.vmem [resolvable:$true] %s1509
          %1515 = dma.vmem_to_hbm [thread:$0]  %s1510, 2048, %s1508, %s1493, 128, 128, 8
        $region36: #{tpu_custom_call.1} parent=31 // pred_fallthru
          _
      $region32: #{tpu_custom_call.1} parent=5 // pred_fallthru
        _
      %p1516 = scmp.le.s32.totalorder 2, %s12
      // Predicated region
      $region37: #{tpu_custom_call.1} parent=5 // pred_check
        %p1517 = pneg %p1516
      $region38: #{tpu_custom_call.1} parent=5 // pred_check_branch
        %1519 = sbr.rel (%p1517) target = $region40
      $region39: #{tpu_custom_call.1} parent=5 // pred_region
        %s1520 = ssub.s32 %s12, 2
        // Predicated region
        $region41: #{tpu_custom_call.1} parent=39 // pred_check
          %p1521 = pneg %p123
        $region42: #{tpu_custom_call.1} parent=39 // pred_check_branch
          %1523 = sbr.rel (%p1521) target = $region44
        $region43: #{tpu_custom_call.1} parent=39 // pred_region
          %s1524 = sand.u32 %s108, 1
          %s1525 = scalar_lea.sflag [#allocation3], %s1524
          %s1526 = sand.u32 %s108, 1
          %s1527 = smul.addr %s1526, 128
          %s1528 = scalar_lea.vmem [#allocation2], %s1527
          %1529 = dma.done %s1525, 2048
        $region44: #{tpu_custom_call.1} parent=39 // pred_fallthru
          _
      $region40: #{tpu_custom_call.1} parent=5 // pred_fallthru
        _
    $region6: #{tpu_custom_call.1} parent=1 // loop_footer
      %s16 = sadd.s32 1, %s12
    $region7: #{tpu_custom_call.1} parent=1 // loop_footer_branch
      %11 = sbr.rel target = $region3
    $region8: #{tpu_custom_call.1} parent=1 // loop_exit
      _
    %1530 = vsyncpa [#allocation3], 1
    %s1531 = scalar_lea.sflag [#allocation3], 1
    %1532 = vsyncpa %s1531, 1

</llo_original>
